<compile_context>
chip_gen: v7x
topology: tpu7x:2x2x1
jax: 0.10.0
libtpu: 0.0.40
codegen_flags: <defaults>
</compile_context>

<pallas_src>
import jax
import jax.numpy as jnp
from jax.experimental import pallas as pl
from jax.experimental.pallas import tpu as pltpu


def _transition_kernel(x_ref, scale_ref, shift_ref, w_ref, o_ref):
    # x_ref block: (1, 4, tile_M, Cin); axis 1 = the four 2x2 pool taps.
    x = x_ref[0].astype(jnp.float32)                          # (4, tile_M, Cin)
    # BatchNorm (folded per-channel affine) + ReLU on the VPU, f32 math.
    y = jnp.maximum(x * scale_ref[...] + shift_ref[...], 0.0)
    # 2x2 stride-2 average pool: add the four tap planes (leading-dim slices).
    pooled = (y[0] + y[1] + y[2] + y[3]) * 0.25               # (tile_M, Cin)
    # 1x1 conv AFTER the pool (they commute): MXU matmul, f32 accumulation.
    z = jnp.dot(pooled.astype(w_ref.dtype), w_ref[...],
                preferred_element_type=jnp.float32)           # (tile_M, Cout)
    o_ref[...] = z[None].astype(o_ref.dtype)


def _pick_spatial_tile(M, Cin, itemsize, target_bytes=2 * 1024 * 1024):
    """Largest sublane-aligned divisor of M whose 4-tap input block fits budget."""
    cands = [t for t in range(8, M + 1, 8) if M % t == 0]
    if not cands:
        return M                                      # tiny / odd spatial extent
    pref = [t for t in cands if t <= M // 2] or cands  # prefer >=2 tiles (megacore)
    fit = [t for t in pref if 4 * t * Cin * itemsize <= target_bytes]
    return max(fit) if fit else min(pref)


def transition_forward(x_nchw, gamma, beta, running_mean, running_var,
                       conv_weight, eps=1e-5, matmul_dtype=None):
    N, Cin, H, W = x_nchw.shape
    Cout = conv_weight.shape[0]
    Hout, Wout = H // 2, W // 2
    M = Hout * Wout

    # AvgPool2d(2,2) drops a trailing odd row/col; crop to match.
    if H % 2 or W % 2:
        x_nchw = x_nchw[:, :, :2 * Hout, :2 * Wout]

    # Fold eval-mode BatchNorm into a per-channel scale/shift (f32).
    g32 = gamma.astype(jnp.float32)
    inv_std = 1.0 / jnp.sqrt(running_var.astype(jnp.float32) + eps)
    scale = (g32 * inv_std).reshape(1, Cin)
    shift = (beta.astype(jnp.float32)
             - running_mean.astype(jnp.float32) * g32 * inv_std).reshape(1, Cin)

    # MXU operand dtype: bf16 inputs stay bf16; f32 inputs stay f32 unless the
    # caller opts into bf16 operands (f32 accumulation either way).
    if matmul_dtype is None:
        matmul_dtype = jnp.bfloat16 if x_nchw.dtype == jnp.bfloat16 else x_nchw.dtype
    w2 = conv_weight.reshape(Cout, Cin).T.astype(matmul_dtype)   # (Cin, Cout)

    # Gather the four 2x2 pool taps while going channels-last.  This is a
    # single XLA transpose of the input (the same bytes an NCHW->NHWC
    # transpose would cost); a channels-last caller could pre-gather taps and
    # skip it entirely.
    x_taps = (x_nchw.reshape(N, Cin, Hout, 2, Wout, 2)
              .transpose(0, 3, 5, 2, 4, 1)              # (N, 2, 2, Hout, Wout, Cin)
              .reshape(N, 4, M, Cin))

    x_item = jnp.dtype(x_nchw.dtype).itemsize
    w_item = jnp.dtype(w2.dtype).itemsize
    tile_m = _pick_spatial_tile(M, Cin, x_item)
    grid = (N, M // tile_m)

    flops = int(N * (16 * M * Cin            # BN affine + ReLU + pool adds
                     + 2 * M * Cin * Cout))  # 1x1 conv on pooled pixels
    bytes_accessed = int(N * 4 * M * Cin * x_item + Cin * Cout * w_item
                         + 2 * Cin * 4 + N * M * Cout * x_item)

    out_flat = pl.pallas_call(
        _transition_kernel,
        out_shape=jax.ShapeDtypeStruct((N, M, Cout), x_nchw.dtype),
        grid=grid,
        in_specs=[
            pl.BlockSpec((1, 4, tile_m, Cin), lambda n, m: (n, 0, m, 0)),  # x taps
            pl.BlockSpec((1, Cin), lambda n, m: (0, 0)),                   # BN scale
            pl.BlockSpec((1, Cin), lambda n, m: (0, 0)),                   # BN shift
            pl.BlockSpec((Cin, Cout), lambda n, m: (0, 0)),                # conv w
        ],
        out_specs=pl.BlockSpec((1, tile_m, Cout), lambda n, m: (n, m, 0)),
        compiler_params=pltpu.CompilerParams(
            dimension_semantics=("parallel", "parallel"),
            vmem_limit_bytes=32 * 1024 * 1024),
        cost_estimate=pl.CostEstimate(flops=flops, transcendentals=0,
                                      bytes_accessed=bytes_accessed),
    )(x_taps, scale, shift, w2)

    # Back to the module's NCHW output layout (runs on the 4x-smaller tensor).
    out = out_flat.reshape(N, Hout, Wout, Cout)
    return jnp.transpose(out, (0, 3, 1, 2))


def _reference(x, gamma, beta, mean, var, w, eps=1e-5):
    xb = (x - mean[None, :, None, None]) / jnp.sqrt(var[None, :, None, None] + eps)
    xb = xb * gamma[None, :, None, None] + beta[None, :, None, None]
    xb = jnp.maximum(xb, 0.0)
    z = jnp.einsum('nchw,oc->nohw', xb, w.reshape(w.shape[0], w.shape[1]))
    N, Co, H, W = z.shape
    return z.reshape(N, Co, H // 2, 2, W // 2, 2).mean(axis=(3, 5))


if __name__ == "__main__":
    N, Cin, Cout, H, W = 2, 8, 4, 16, 16
    key = jax.random.PRNGKey(0)
    k1, k2, k3, k4, k5, k6 = jax.random.split(key, 6)

    x = jax.random.normal(k1, (N, Cin, H, W), dtype=jnp.float32)
    gamma = 1.0 + 0.1 * jax.random.normal(k2, (Cin,), dtype=jnp.float32)
    beta = 0.1 * jax.random.normal(k3, (Cin,), dtype=jnp.float32)
    running_mean = 0.1 * jax.random.normal(k4, (Cin,), dtype=jnp.float32)
    running_var = jax.random.uniform(k5, (Cin,), dtype=jnp.float32,
                                     minval=0.5, maxval=1.5)
    conv_w = 0.2 * jax.random.normal(k6, (Cout, Cin, 1, 1), dtype=jnp.float32)

    ref = _reference(x, gamma, beta, running_mean, running_var, conv_w)

    # f32 end-to-end path (matches the PyTorch module's default dtype).
    out = transition_forward(x, gamma, beta, running_mean, running_var, conv_w)
    out = jax.block_until_ready(out)
    assert out.shape == (N, Cout, H // 2, W // 2), out.shape
    assert jnp.allclose(out, ref, atol=1e-4, rtol=1e-4), \
        float(jnp.max(jnp.abs(out - ref)))

    # bf16-MXU-operand path (perf configuration for v5e/v6e/v7x); looser tol.
    out_bf16 = transition_forward(x, gamma, beta, running_mean, running_var,
                                  conv_w, matmul_dtype=jnp.bfloat16)
    out_bf16 = jax.block_until_ready(out_bf16)
    assert jnp.allclose(out_bf16, ref, atol=5e-2, rtol=5e-2)

    print("KERNEL_OK")
</pallas_src>

<mosaic_0001>
module attributes {stable_mosaic.version = 11 : i64} {
  func.func @_transition_kernel(%arg0: i32, %arg1: i32, %arg2: memref<1x4x32x8xf32, #tpu.memory_space<vmem>>, %arg3: memref<1x8xf32, #tpu.memory_space<vmem>>, %arg4: memref<1x8xf32, #tpu.memory_space<vmem>>, %arg5: memref<8x4xf32, #tpu.memory_space<vmem>>, %arg6: memref<1x32x4xf32, #tpu.memory_space<vmem>>) attributes {dimension_semantics = [#tpu.dimension_semantics<parallel>, #tpu.dimension_semantics<parallel>], iteration_bounds = array<i64: 2, 2>, scalar_prefetch = 0 : i64, scratch_operands = 0 : i64, tpu.core_type = #tpu.core_type<tc>, window_params = [{transform_indices = @transform_0, window_bounds = array<i64: 1, 4, 32, 8>}, {pipeline_mode = #tpu.pipeline_mode<synchronous>, transform_indices = @transform_1, window_bounds = array<i64: 1, 8>}, {pipeline_mode = #tpu.pipeline_mode<synchronous>, transform_indices = @transform_2, window_bounds = array<i64: 1, 8>}, {pipeline_mode = #tpu.pipeline_mode<synchronous>, transform_indices = @transform_3, window_bounds = array<i64: 8, 4>}, {transform_indices = @transform_4, window_bounds = array<i64: 1, 32, 4>}]} {
    %c0 = arith.constant 0 : index
    %c0_0 = arith.constant 0 : index
    %c0_1 = arith.constant 0 : index
    %c0_2 = arith.constant 0 : index
    %0 = vector.load %arg2[%c0, %c0_0, %c0_1, %c0_2] : memref<1x4x32x8xf32, #tpu.memory_space<vmem>>, vector<1x4x32x8xf32>
    %1 = vector.shape_cast %0 : vector<1x4x32x8xf32> to vector<4x32x8xf32>
    %c0_3 = arith.constant 0 : index
    %c0_4 = arith.constant 0 : index
    %2 = vector.load %arg3[%c0_3, %c0_4] : memref<1x8xf32, #tpu.memory_space<vmem>>, vector<1x8xf32>
    %3 = vector.shape_cast %2 : vector<1x8xf32> to vector<1x1x8xf32>
    %4 = vector.broadcast %3 : vector<1x1x8xf32> to vector<4x32x8xf32>
    %5 = arith.mulf %1, %4 : vector<4x32x8xf32>
    %c0_5 = arith.constant 0 : index
    %c0_6 = arith.constant 0 : index
    %6 = vector.load %arg4[%c0_5, %c0_6] : memref<1x8xf32, #tpu.memory_space<vmem>>, vector<1x8xf32>
    %7 = vector.shape_cast %6 : vector<1x8xf32> to vector<1x1x8xf32>
    %8 = vector.broadcast %7 : vector<1x1x8xf32> to vector<4x32x8xf32>
    %9 = arith.addf %5, %8 : vector<4x32x8xf32>
    %cst = arith.constant 0.000000e+00 : f32
    %10 = vector.broadcast %cst : f32 to vector<4x32x8xf32>
    %11 = arith.maximumf %9, %10 : vector<4x32x8xf32>
    %12 = vector.extract_strided_slice %11 {offsets = [0, 0, 0], sizes = [1, 32, 8], strides = [1, 1, 1]} : vector<4x32x8xf32> to vector<1x32x8xf32>
    %13 = vector.shape_cast %12 : vector<1x32x8xf32> to vector<32x8xf32>
    %14 = vector.extract_strided_slice %11 {offsets = [1, 0, 0], sizes = [1, 32, 8], strides = [1, 1, 1]} : vector<4x32x8xf32> to vector<1x32x8xf32>
    %15 = vector.shape_cast %14 : vector<1x32x8xf32> to vector<32x8xf32>
    %16 = arith.addf %13, %15 : vector<32x8xf32>
    %17 = vector.extract_strided_slice %11 {offsets = [2, 0, 0], sizes = [1, 32, 8], strides = [1, 1, 1]} : vector<4x32x8xf32> to vector<1x32x8xf32>
    %18 = vector.shape_cast %17 : vector<1x32x8xf32> to vector<32x8xf32>
    %19 = arith.addf %16, %18 : vector<32x8xf32>
    %20 = vector.extract_strided_slice %11 {offsets = [3, 0, 0], sizes = [1, 32, 8], strides = [1, 1, 1]} : vector<4x32x8xf32> to vector<1x32x8xf32>
    %21 = vector.shape_cast %20 : vector<1x32x8xf32> to vector<32x8xf32>
    %22 = arith.addf %19, %21 : vector<32x8xf32>
    %cst_7 = arith.constant 2.500000e-01 : f32
    %23 = vector.broadcast %cst_7 : f32 to vector<32x8xf32>
    %24 = arith.mulf %22, %23 : vector<32x8xf32>
    %c0_8 = arith.constant 0 : index
    %c0_9 = arith.constant 0 : index
    %25 = vector.load %arg5[%c0_8, %c0_9] : memref<8x4xf32, #tpu.memory_space<vmem>>, vector<8x4xf32>
    %cst_10 = arith.constant dense<0.000000e+00> : vector<32x4xf32>
    %26 = tpu.matmul %24, %25, %cst_10 {dimension_numbers = #tpu.dot_dimension_numbers<[1], [0], [0], [1], [0, 0, 1, 1], [], []>} : vector<32x8xf32>, vector<8x4xf32>, vector<32x4xf32> -> vector<32x4xf32>
    %27 = vector.shape_cast %26 : vector<32x4xf32> to vector<1x32x4xf32>
    %c0_11 = arith.constant 0 : index
    %c0_12 = arith.constant 0 : index
    %c0_13 = arith.constant 0 : index
    %28 = vector.load %arg6[%c0_11, %c0_12, %c0_13] : memref<1x32x4xf32, #tpu.memory_space<vmem>>, vector<1x32x4xf32>
    tpu.vector_store %arg6[%c0_11, %c0_12, %c0_13], %27 {strides = array<i32>} : memref<1x32x4xf32, #tpu.memory_space<vmem>>, vector<1x32x4xf32>,
    return
  }
  func.func @transform_0(%arg0: i32, %arg1: i32) -> (i32, i32, i32, i32) {
    %c0_i32 = arith.constant 0 : i32
    %c0_i32_0 = arith.constant 0 : i32
    %c0_i32_1 = arith.constant 0 : i32
    return %arg0, %c0_i32, %arg1, %c0_i32_0 : i32, i32, i32, i32
  }
  func.func @transform_1(%arg0: i32, %arg1: i32) -> (i32, i32) {
    %c0_i32 = arith.constant 0 : i32
    %c0_i32_0 = arith.constant 0 : i32
    %c0_i32_1 = arith.constant 0 : i32
    return %c0_i32, %c0_i32_0 : i32, i32
  }
  func.func @transform_2(%arg0: i32, %arg1: i32) -> (i32, i32) {
    %c0_i32 = arith.constant 0 : i32
    %c0_i32_0 = arith.constant 0 : i32
    %c0_i32_1 = arith.constant 0 : i32
    return %c0_i32, %c0_i32_0 : i32, i32
  }
  func.func @transform_3(%arg0: i32, %arg1: i32) -> (i32, i32) {
    %c0_i32 = arith.constant 0 : i32
    %c0_i32_0 = arith.constant 0 : i32
    %c0_i32_1 = arith.constant 0 : i32
    return %c0_i32, %c0_i32_0 : i32, i32
  }
  func.func @transform_4(%arg0: i32, %arg1: i32) -> (i32, i32, i32) {
    %c0_i32 = arith.constant 0 : i32
    %c0_i32_0 = arith.constant 0 : i32
    return %arg0, %arg1, %c0_i32 : i32, i32, i32
  }
}

</mosaic_0001>

<llo_original>
// kernel: tpu_custom_call.1
$region0: #{tpu_custom_call.1}
  #allocation0 [shape = 'u32[]', space=smem, size = 0x4, offset = 0x4, fixed_abs, tag = 'smem constant byte address 0x4 - core index']
  #allocation1 [shape = 'u32[144,128]{1,0:T(1,128)}', space=vmem, size = 0x12000, scoped, tag = 'internal scratch']
  %s0 = inlined_call_operand.vmem [shape: f32[2,4,64,8], index: 0, kind: input, shape index: {}]
  %s1 = inlined_call_operand.vmem [shape: f32[1,8], index: 1, kind: input, shape index: {}]
  %s2 = inlined_call_operand.vmem [shape: f32[1,8], index: 2, kind: input, shape index: {}]
  %s3 = inlined_call_operand.vmem [shape: f32[8,4], index: 3, kind: input, shape index: {}]
  %s4 = inlined_call_operand.vmem [shape: f32[2,64,4], index: 4, kind: output, shape index: {}]
  %s5 = sld [smem:[#allocation0]]
  $region87: #{tpu_custom_call.1} parent=0
    _
  %s7 = ssub.s32 1, %s5
  %s8 = scalar_select 0, %s7, %s5
  $region1: #{tpu_custom_call.1} parent=0
    #allocation2 [shape = 'u8[131072]{0}', space=vmem, size = 0x20000, scoped, tag = 'input window, operand 0']
    loop: start=0, step=1, limit=6
    $region2: #{tpu_custom_call.1} parent=1 // loop_pre_header
      _
    $region3: #{tpu_custom_call.1} parent=1 // loop_header
      %s10 = sphi 0, %s14
      %p11 = scmp.ge.s32.totalorder %s10, 6
      %s17 = sphi 0, %s29
      %s18 = sphi 0, %s25
      %s19 = sphi 0, %s17
      %s20 = sphi 0, %s18
      %s21 = sphi 0, %s19
      %s22 = sphi 0, %s20
      %s34 = sphi 0, %s36
      %s37 = sphi 0, %s34
      %s38 = sphi 0, %s37
      %s54 = sphi 0, %s38
      %s58 = sphi 0, %s58
      %s60 = sphi 0, %s58
      %s61 = sphi 0, %s60
      %s75 = sphi 0, %s61
      %s79 = sphi 0, %s79
      %s81 = sphi 0, %s79
      %s82 = sphi 0, %s81
      %s96 = sphi 0, %s82
      %s100 = sphi 0, %s100
      %s102 = sphi 0, %s100
      %s103 = sphi 0, %s102
      %s117 = sphi 0, %s103
      %s125 = sphi 0, %s127
      %s128 = sphi 0, %s125
      %s129 = sphi 0, %s128
      %s145 = sphi 0, %s129
    $region4: #{tpu_custom_call.1} parent=1 // loop_header_branch
      %13 = sbr.rel (%p11) target = $region8
    $region5: #{tpu_custom_call.1} parent=1 // loop_body
      %s15 = ssub.s32 %s10, 1
      %s16 = ssub.s32 %s10, 2
      %s23 = sadd.s32 1, %s18
      %p24 = scmp.ge.s32.totalorder %s23, 2
      %s25 = scalar_select %p24, 0, %s23
      %s26 = sadd.s32 1, %s17
      %s27 = scalar_select %p24, %s26, %s17
      %p28 = scmp.ge.s32.totalorder %s27, 2
      %s29 = scalar_select %p28, 0, %s27
      %s30 = ssub.s32 %s17, %s29
      %s31 = ssub.s32 %s18, %s25
      %s32 = sor.u32 %s30, %s31
      %p33 = scmp.eq.s32.totalorder %s32, 0
      %s35 = sadd.s32 %s34, 1
      %s36 = scalar_select %p33, %s34, %s35
      %p39 = pneg %p33
      %p40 = scmp.eq.s32.totalorder %s10, 3
      %p41 = por %p39, %p40
      %p42 = scmp.ne.s32.totalorder %s34, %s37
      %p43 = scmp.eq.s32.totalorder %s10, 0
      %p44 = por %p42, %p43
      %p45 = scmp.ne.s32.totalorder %s34, %s37
      %p46 = scmp.eq.s32.totalorder %s15, 3
      %p47 = por %p45, %p46
      %p48 = scmp.ne.s32.totalorder %s37, %s38
      %p49 = scmp.eq.s32.totalorder %s15, 0
      %p50 = por %p48, %p49
      %p51 = scmp.ne.s32.totalorder %s37, %s38
      %p52 = scmp.eq.s32.totalorder %s16, 3
      %p53 = por %p51, %p52
      %p55 = scmp.ne.s32.totalorder %s38, %s54
      %p56 = scmp.eq.s32.totalorder %s16, 0
      %p57 = por %p55, %p56
      %s59 = sadd.s32 %s58, 1
      %p62 = scmp.eq.s32.totalorder %s10, 3
      %p63 = scmp.ne.s32.totalorder %s58, %s60
      %p64 = scmp.eq.s32.totalorder %s10, 0
      %p65 = por %p63, %p64
      %p66 = scmp.ne.s32.totalorder %s58, %s60
      %p67 = scmp.eq.s32.totalorder %s15, 3
      %p68 = por %p66, %p67
      %p69 = scmp.ne.s32.totalorder %s60, %s61
      %p70 = scmp.eq.s32.totalorder %s15, 0
      %p71 = por %p69, %p70
      %p72 = scmp.ne.s32.totalorder %s60, %s61
      %p73 = scmp.eq.s32.totalorder %s16, 3
      %p74 = por %p72, %p73
      %p76 = scmp.ne.s32.totalorder %s61, %s75
      %p77 = scmp.eq.s32.totalorder %s16, 0
      %p78 = por %p76, %p77
      %s80 = sadd.s32 %s79, 1
      %p83 = scmp.eq.s32.totalorder %s10, 3
      %p84 = scmp.ne.s32.totalorder %s79, %s81
      %p85 = scmp.eq.s32.totalorder %s10, 0
      %p86 = por %p84, %p85
      %p87 = scmp.ne.s32.totalorder %s79, %s81
      %p88 = scmp.eq.s32.totalorder %s15, 3
      %p89 = por %p87, %p88
      %p90 = scmp.ne.s32.totalorder %s81, %s82
      %p91 = scmp.eq.s32.totalorder %s15, 0
      %p92 = por %p90, %p91
      %p93 = scmp.ne.s32.totalorder %s81, %s82
      %p94 = scmp.eq.s32.totalorder %s16, 3
      %p95 = por %p93, %p94
      %p97 = scmp.ne.s32.totalorder %s82, %s96
      %p98 = scmp.eq.s32.totalorder %s16, 0
      %p99 = por %p97, %p98
      %s101 = sadd.s32 %s100, 1
      %p104 = scmp.eq.s32.totalorder %s10, 3
      %p105 = scmp.ne.s32.totalorder %s100, %s102
      %p106 = scmp.eq.s32.totalorder %s10, 0
      %p107 = por %p105, %p106
      %p108 = scmp.ne.s32.totalorder %s100, %s102
      %p109 = scmp.eq.s32.totalorder %s15, 3
      %p110 = por %p108, %p109
      %p111 = scmp.ne.s32.totalorder %s102, %s103
      %p112 = scmp.eq.s32.totalorder %s15, 0
      %p113 = por %p111, %p112
      %p114 = scmp.ne.s32.totalorder %s102, %s103
      %p115 = scmp.eq.s32.totalorder %s16, 3
      %p116 = por %p114, %p115
      %p118 = scmp.ne.s32.totalorder %s103, %s117
      %p119 = scmp.eq.s32.totalorder %s16, 0
      %p120 = por %p118, %p119
      %s121 = ssub.s32 %s17, %s29
      %s122 = ssub.s32 %s18, %s25
      %s123 = sor.u32 %s121, %s122
      %p124 = scmp.eq.s32.totalorder %s123, 0
      %s126 = sadd.s32 %s125, 1
      %s127 = scalar_select %p124, %s125, %s126
      %p130 = pneg %p124
      %p131 = scmp.eq.s32.totalorder %s10, 3
      %p132 = por %p130, %p131
      %p133 = scmp.ne.s32.totalorder %s125, %s128
      %p134 = scmp.eq.s32.totalorder %s10, 0
      %p135 = por %p133, %p134
      %p136 = scmp.ne.s32.totalorder %s125, %s128
      %p137 = scmp.eq.s32.totalorder %s15, 3
      %p138 = por %p136, %p137
      %p139 = scmp.ne.s32.totalorder %s128, %s129
      %p140 = scmp.eq.s32.totalorder %s15, 0
      %p141 = por %p139, %p140
      %p142 = scmp.ne.s32.totalorder %s128, %s129
      %p143 = scmp.eq.s32.totalorder %s16, 3
      %p144 = por %p142, %p143
      %p146 = scmp.ne.s32.totalorder %s129, %s145
      %p147 = scmp.eq.s32.totalorder %s16, 0
      %p148 = por %p146, %p147
      %p149 = scmp.le.s32.totalorder 1, %s10
      %p150 = scmp.lt.s32.totalorder %s10, 5
      %p151 = pnand %p149, %p150
      %p152 = pneg %p151
      // Predicated region
      $region9: #{tpu_custom_call.1} parent=5 // pred_check
        _
      $region10: #{tpu_custom_call.1} parent=5 // pred_check_branch
        %154 = sbr.rel (%p151) target = $region12
      $region11: #{tpu_custom_call.1} parent=5 // pred_region
        %s155 = ssub.s32 %s10, 1
        // Predicated region
        $region13: #{tpu_custom_call.1} parent=11 // pred_check
          %p156 = pneg %p71
        $region14: #{tpu_custom_call.1} parent=11 // pred_check_branch
          %158 = sbr.rel (%p156) target = $region16
        $region15: #{tpu_custom_call.1} parent=11 // pred_region
          _
        $region16: #{tpu_custom_call.1} parent=11 // pred_fallthru
          _
        // Predicated region
        $region17: #{tpu_custom_call.1} parent=11 // pred_check
          %p159 = pneg %p92
        $region18: #{tpu_custom_call.1} parent=11 // pred_check_branch
          %161 = sbr.rel (%p159) target = $region20
        $region19: #{tpu_custom_call.1} parent=11 // pred_region
          _
        $region20: #{tpu_custom_call.1} parent=11 // pred_fallthru
          _
        // Predicated region
        $region21: #{tpu_custom_call.1} parent=11 // pred_check
          %p162 = pneg %p113
        $region22: #{tpu_custom_call.1} parent=11 // pred_check_branch
          %164 = sbr.rel (%p162) target = $region24
        $region23: #{tpu_custom_call.1} parent=11 // pred_region
          _
        $region24: #{tpu_custom_call.1} parent=11 // pred_fallthru
          _
      $region12: #{tpu_custom_call.1} parent=5 // pred_fallthru
        _
      %p165 = scmp.lt.s32.totalorder %s10, 4
      // Predicated region
      $region25: #{tpu_custom_call.1} parent=5 // pred_check
        %p166 = pneg %p165
      $region26: #{tpu_custom_call.1} parent=5 // pred_check_branch
        %168 = sbr.rel (%p166) target = $region28
      $region27: #{tpu_custom_call.1} parent=5 // pred_region
        // Predicated region
        $region29: #{tpu_custom_call.1} parent=27 // pred_check
          %p169 = pneg %p44
        $region30: #{tpu_custom_call.1} parent=27 // pred_check_branch
          %171 = sbr.rel (%p169) target = $region32
        $region31: #{tpu_custom_call.1} parent=27 // pred_region
          %s172 = sand.u32 %s34, 1
          %s173 = sand.u32 %s34, 1
          %s174 = smul.addr %s173, 128
          %s175 = scalar_lea.vmem [#allocation2], %s174
          %s176 = smul.u32 4, %s18
          %s177 = smul.addr %s17, 32
          %s178 = sadd.s32 %s176, %s177
          %s179 = smul.addr %s178, 8
          %s180 = scalar_lea.vmem %s0, %s179
          // Predicated region
          $region33: #{tpu_custom_call.1} parent=31 // pred_check
            _
          $region34: #{tpu_custom_call.1} parent=31 // pred_check_branch
            %182 = sbr.rel (0) target = $region36
          $region35: #{tpu_custom_call.1} parent=31 // pred_region
            // Predicated region
            $region37: #{tpu_custom_call.1} parent=35 // pred_check
              _
            $region38: #{tpu_custom_call.1} parent=35 // pred_check_branch
              %184 = sbr.rel (0) target = $region40
            $region39: #{tpu_custom_call.1} parent=35 // pred_region
              // Predicated region
              $region52: #{tpu_custom_call.1} parent=39 // pred_check
                _
              $region53: #{tpu_custom_call.1} parent=39 // pred_check_branch
                %229 = sbr.rel (0) target = $region55
              $region54: #{tpu_custom_call.1} parent=39 // pred_region
                loop: start=0, step=1, limit=1
                $region56: #{tpu_custom_call.1} parent=54 // loop_pre_header
                  _
                $region57: #{tpu_custom_call.1} parent=54 // loop_header
                  %s231 = sphi 0, %s235
                  %p232 = scmp.ge.s32.totalorder %s231, 1
                  %s236 = sphi %s180, %s180
                  %s237 = sphi %s175, %s175
                $region58: #{tpu_custom_call.1} parent=54 // loop_header_branch
                  %234 = sbr.rel (%p232) target = $region62
                $region59: #{tpu_custom_call.1} parent=54 // loop_body
                  %v238 = vld [vmem:[%s236] sm:$0xff]
                  %239 = vst [vmem:[%s237] sm:$0xff] %v238
                  %v240 = vld [vmem:[%s236 + $0x8] sm:$0xff]
                  %241 = vst [vmem:[%s237 + $0x8] sm:$0xff] %v240
                  %v242 = vld [vmem:[%s236 + $0x10] sm:$0xff]
                  %243 = vst [vmem:[%s237 + $0x10] sm:$0xff] %v242
                  %v244 = vld [vmem:[%s236 + $0x18] sm:$0xff]
                  %245 = vst [vmem:[%s237 + $0x18] sm:$0xff] %v244
                  %v246 = vld [vmem:[%s236 + $0x40] sm:$0xff]
                  %247 = vst [vmem:[%s237 + $0x20] sm:$0xff] %v246
                  %v248 = vld [vmem:[%s236 + $0x48] sm:$0xff]
                  %249 = vst [vmem:[%s237 + $0x28] sm:$0xff] %v248
                  %v250 = vld [vmem:[%s236 + $0x50] sm:$0xff]
                  %251 = vst [vmem:[%s237 + $0x30] sm:$0xff] %v250
                  %v252 = vld [vmem:[%s236 + $0x58] sm:$0xff]
                  %253 = vst [vmem:[%s237 + $0x38] sm:$0xff] %v252
                  %v254 = vld [vmem:[%s236 + $0x80] sm:$0xff]
                  %255 = vst [vmem:[%s237 + $0x40] sm:$0xff] %v254
                  %v256 = vld [vmem:[%s236 + $0x88] sm:$0xff]
                  %257 = vst [vmem:[%s237 + $0x48] sm:$0xff] %v256
                  %v258 = vld [vmem:[%s236 + $0x90] sm:$0xff]
                  %259 = vst [vmem:[%s237 + $0x50] sm:$0xff] %v258
                  %v260 = vld [vmem:[%s236 + $0x98] sm:$0xff]
                  %261 = vst [vmem:[%s237 + $0x58] sm:$0xff] %v260
                  %v262 = vld [vmem:[%s236 + $0xc0] sm:$0xff]
                  %263 = vst [vmem:[%s237 + $0x60] sm:$0xff] %v262
                  %v264 = vld [vmem:[%s236 + $0xc8] sm:$0xff]
                  %265 = vst [vmem:[%s237 + $0x68] sm:$0xff] %v264
                  %v266 = vld [vmem:[%s236 + $0xd0] sm:$0xff]
                  %267 = vst [vmem:[%s237 + $0x70] sm:$0xff] %v266
                  %v268 = vld [vmem:[%s236 + $0xd8] sm:$0xff]
                  %269 = vst [vmem:[%s237 + $0x78] sm:$0xff] %v268
                $region60: #{tpu_custom_call.1} parent=54 // loop_footer
                  %s235 = sadd.s32 1, %s231
                $region61: #{tpu_custom_call.1} parent=54 // loop_footer_branch
                  %230 = sbr.rel target = $region57
                $region62: #{tpu_custom_call.1} parent=54 // loop_exit
                  _
              $region55: #{tpu_custom_call.1} parent=39 // pred_fallthru
                _
              // Predicated region
              $region63: #{tpu_custom_call.1} parent=39 // pred_check
                _
              $region64: #{tpu_custom_call.1} parent=39 // pred_check_branch
                %271 = sbr.rel target = $region66
              $region65: #{tpu_custom_call.1} parent=39 // pred_region
                _
              $region66: #{tpu_custom_call.1} parent=39 // pred_fallthru
                _
            $region40: #{tpu_custom_call.1} parent=35 // pred_fallthru
              _
            // Predicated region
            $region41: #{tpu_custom_call.1} parent=35 // pred_check
              _
            $region42: #{tpu_custom_call.1} parent=35 // pred_check_branch
              %186 = sbr.rel target = $region44
            $region43: #{tpu_custom_call.1} parent=35 // pred_region
              loop: start=0, step=1, limit=1
              $region45: #{tpu_custom_call.1} parent=43 // loop_pre_header
                _
              $region46: #{tpu_custom_call.1} parent=43 // loop_header
                %s189 = sphi 0, %s193
                %p190 = scmp.ge.s32.totalorder %s189, 1
                %s194 = sphi %s180, %s180
                %s195 = sphi %s175, %s175
              $region47: #{tpu_custom_call.1} parent=43 // loop_header_branch
                %192 = sbr.rel (%p190) target = $region51
              $region48: #{tpu_custom_call.1} parent=43 // loop_body
                %v196 = vld [vmem:[%s194] sm:$0xff]
                %197 = vst [vmem:[%s195] sm:$0xff] %v196
                %v198 = vld [vmem:[%s194 + $0x8] sm:$0xff]
                %199 = vst [vmem:[%s195 + $0x8] sm:$0xff] %v198
                %v200 = vld [vmem:[%s194 + $0x10] sm:$0xff]
                %201 = vst [vmem:[%s195 + $0x10] sm:$0xff] %v200
                %v202 = vld [vmem:[%s194 + $0x18] sm:$0xff]
                %203 = vst [vmem:[%s195 + $0x18] sm:$0xff] %v202
                %v204 = vld [vmem:[%s194 + $0x40] sm:$0xff]
                %205 = vst [vmem:[%s195 + $0x20] sm:$0xff] %v204
                %v206 = vld [vmem:[%s194 + $0x48] sm:$0xff]
                %207 = vst [vmem:[%s195 + $0x28] sm:$0xff] %v206
                %v208 = vld [vmem:[%s194 + $0x50] sm:$0xff]
                %209 = vst [vmem:[%s195 + $0x30] sm:$0xff] %v208
                %v210 = vld [vmem:[%s194 + $0x58] sm:$0xff]
                %211 = vst [vmem:[%s195 + $0x38] sm:$0xff] %v210
                %v212 = vld [vmem:[%s194 + $0x80] sm:$0xff]
                %213 = vst [vmem:[%s195 + $0x40] sm:$0xff] %v212
                %v214 = vld [vmem:[%s194 + $0x88] sm:$0xff]
                %215 = vst [vmem:[%s195 + $0x48] sm:$0xff] %v214
                %v216 = vld [vmem:[%s194 + $0x90] sm:$0xff]
                %217 = vst [vmem:[%s195 + $0x50] sm:$0xff] %v216
                %v218 = vld [vmem:[%s194 + $0x98] sm:$0xff]
                %219 = vst [vmem:[%s195 + $0x58] sm:$0xff] %v218
                %v220 = vld [vmem:[%s194 + $0xc0] sm:$0xff]
                %221 = vst [vmem:[%s195 + $0x60] sm:$0xff] %v220
                %v222 = vld [vmem:[%s194 + $0xc8] sm:$0xff]
                %223 = vst [vmem:[%s195 + $0x68] sm:$0xff] %v222
                %v224 = vld [vmem:[%s194 + $0xd0] sm:$0xff]
                %225 = vst [vmem:[%s195 + $0x70] sm:$0xff] %v224
                %v226 = vld [vmem:[%s194 + $0xd8] sm:$0xff]
                %227 = vst [vmem:[%s195 + $0x78] sm:$0xff] %v226
              $region49: #{tpu_custom_call.1} parent=43 // loop_footer
                %s193 = sadd.s32 1, %s189
              $region50: #{tpu_custom_call.1} parent=43 // loop_footer_branch
                %188 = sbr.rel target = $region46
              $region51: #{tpu_custom_call.1} parent=43 // loop_exit
                _
            $region44: #{tpu_custom_call.1} parent=35 // pred_fallthru
              _
          $region36: #{tpu_custom_call.1} parent=31 // pred_fallthru
            _
          %272 = vnop
        $region32: #{tpu_custom_call.1} parent=27 // pred_fallthru
          _
      $region28: #{tpu_custom_call.1} parent=5 // pred_fallthru
        _
      %p273 = scmp.le.s32.totalorder 1, %s10
      %p274 = scmp.lt.s32.totalorder %s10, 5
      %p275 = pnand %p273, %p274
      %p276 = pneg %p275
      // Predicated region
      $region67: #{tpu_custom_call.1} parent=5 // pred_check
        _
      $region68: #{tpu_custom_call.1} parent=5 // pred_check_branch
        %278 = sbr.rel (%p275) target = $region70
      $region69: #{tpu_custom_call.1} parent=5 // pred_region
        %s279 = ssub.s32 %s10, 1
        %s280 = sand.u32 %s37, 1
        %s281 = sand.u32 %s37, 1
        %s282 = smul.addr %s281, 128
        %s283 = scalar_lea.vmem [#allocation2], %s282
        // Predicated region
        $region71: #{tpu_custom_call.1} parent=69 // pred_check
          %p284 = pneg %p50
        $region72: #{tpu_custom_call.1} parent=69 // pred_check_branch
          %286 = sbr.rel (%p284) target = $region74
        $region73: #{tpu_custom_call.1} parent=69 // pred_region
          _
        $region74: #{tpu_custom_call.1} parent=69 // pred_fallthru
          _
        %s287 = sand.u32 %s37, 1
        %s288 = sand.u32 %s37, 1
        %s289 = smul.addr %s288, 128
        %s290 = scalar_lea.vmem [#allocation2], %s289
        %p291 = pneg %p50
        %p292 = pneg %p47
        %p293 = pneg %p71
        %p294 = pneg %p68
        %p295 = pneg %p92
        %p296 = pneg %p89
        %p297 = pneg %p113
        %p298 = pneg %p110
        %p299 = pneg %p141
        %p300 = pneg %p138
        %s301 = smul.u32 4, %s20
        %p302 = scmp.lt.s32.totalorder %s19, 1
        %s303 = scalar_select %p302, %s19, 1
        %p304 = scmp.lt.s32.totalorder %s301, 7
        %s305 = scalar_select %p304, %s301, 7
        %s306 = smul.addr %s303, 8
        %s307 = sadd.s32 %s305, %s306
        %s308 = smul.addr %s307, 8
        %s309 = scalar_lea.vmem %s4, %s308
        %s310 = smul.u32 4, %s20
        %s311 = smul.u32 4, %s20
        %p312 = scmp.lt.s32.totalorder %s19, 1
        %s313 = scalar_select %p312, %s19, 1
        %p314 = scmp.lt.s32.totalorder %s311, 7
        %s315 = scalar_select %p314, %s311, 7
        %s316 = smul.addr %s313, 8
        %s317 = sadd.s32 %s315, %s316
        %s318 = smul.addr %s317, 8
        %s319 = scalar_lea.vmem %s4, %s318
        %s320 = smul.u32 4, %s20
        %v321 = vld [vmem:[%s283] sm:$0xff]
        %v322 = vld [vmem:[%s283 + $0x8] sm:$0xff]
        %v323 = vld [vmem:[%s283 + $0x10] sm:$0xff]
        %v324 = vld [vmem:[%s283 + $0x18] sm:$0xff]
        %v325 = vld [vmem:[%s283 + $0x20] sm:$0xff]
        %v326 = vld [vmem:[%s283 + $0x28] sm:$0xff]
        %v327 = vld [vmem:[%s283 + $0x30] sm:$0xff]
        %v328 = vld [vmem:[%s283 + $0x38] sm:$0xff]
        %v329 = vld [vmem:[%s283 + $0x40] sm:$0xff]
        %v330 = vld [vmem:[%s283 + $0x48] sm:$0xff]
        %v331 = vld [vmem:[%s283 + $0x50] sm:$0xff]
        %v332 = vld [vmem:[%s283 + $0x58] sm:$0xff]
        %v333 = vld [vmem:[%s283 + $0x60] sm:$0xff]
        %v334 = vld [vmem:[%s283 + $0x68] sm:$0xff]
        %v335 = vld [vmem:[%s283 + $0x70] sm:$0xff]
        %v336 = vld [vmem:[%s283 + $0x78] sm:$0xff]
        %v337 = vld [vmem:[%s1] sm:$0x1]
        %v339 = vlaneseq
        %v340 = vshrl.u32 %v339, 7
        %v341 = vsub.s32 0, %v340
        %v342 = vrot.slane %v337, %v341
        %v344 = vmul.f32 %v321, %v342
        %v345 = vmul.f32 %v322, %v342
        %v346 = vmul.f32 %v323, %v342
        %v347 = vmul.f32 %v324, %v342
        %v348 = vmul.f32 %v325, %v342
        %v349 = vmul.f32 %v326, %v342
        %v350 = vmul.f32 %v327, %v342
        %v351 = vmul.f32 %v328, %v342
        %v352 = vmul.f32 %v329, %v342
        %v353 = vmul.f32 %v330, %v342
        %v354 = vmul.f32 %v331, %v342
        %v355 = vmul.f32 %v332, %v342
        %v356 = vmul.f32 %v333, %v342
        %v357 = vmul.f32 %v334, %v342
        %v358 = vmul.f32 %v335, %v342
        %v359 = vmul.f32 %v336, %v342
        %v360 = vld [vmem:[%s2] sm:$0x1]
        %v362 = vlaneseq
        %v363 = vshrl.u32 %v362, 7
        %v364 = vsub.s32 0, %v363
        %v365 = vrot.slane %v360, %v364
        %v367 = vadd.f32 %v344, %v365
        %v368 = vadd.f32 %v345, %v365
        %v369 = vadd.f32 %v346, %v365
        %v370 = vadd.f32 %v347, %v365
        %v371 = vadd.f32 %v348, %v365
        %v372 = vadd.f32 %v349, %v365
        %v373 = vadd.f32 %v350, %v365
        %v374 = vadd.f32 %v351, %v365
        %v375 = vadd.f32 %v352, %v365
        %v376 = vadd.f32 %v353, %v365
        %v377 = vadd.f32 %v354, %v365
        %v378 = vadd.f32 %v355, %v365
        %v379 = vadd.f32 %v356, %v365
        %v380 = vadd.f32 %v357, %v365
        %v381 = vadd.f32 %v358, %v365
        %v382 = vadd.f32 %v359, %v365
        %v383 = vmax.f32 %v367, 0.0
        %v384 = vmax.f32 %v368, 0.0
        %v385 = vmax.f32 %v369, 0.0
        %v386 = vmax.f32 %v370, 0.0
        %v387 = vmax.f32 %v371, 0.0
        %v388 = vmax.f32 %v372, 0.0
        %v389 = vmax.f32 %v373, 0.0
        %v390 = vmax.f32 %v374, 0.0
        %v391 = vmax.f32 %v375, 0.0
        %v392 = vmax.f32 %v376, 0.0
        %v393 = vmax.f32 %v377, 0.0
        %v394 = vmax.f32 %v378, 0.0
        %v395 = vmax.f32 %v379, 0.0
        %v396 = vmax.f32 %v380, 0.0
        %v397 = vmax.f32 %v381, 0.0
        %v398 = vmax.f32 %v382, 0.0
        %v399 = vadd.f32 %v383, %v387
        %v400 = vadd.f32 %v384, %v388
        %v401 = vadd.f32 %v385, %v389
        %v402 = vadd.f32 %v386, %v390
        %v403 = vadd.f32 %v399, %v391
        %v404 = vadd.f32 %v400, %v392
        %v405 = vadd.f32 %v401, %v393
        %v406 = vadd.f32 %v402, %v394
        %v407 = vadd.f32 %v403, %v395
        %v408 = vadd.f32 %v404, %v396
        %v409 = vadd.f32 %v405, %v397
        %v410 = vadd.f32 %v406, %v398
        %v411 = vmul.f32 %v407, 0.25
        %v412 = vmul.f32 %v408, 0.25
        %v413 = vmul.f32 %v409, 0.25
        %v414 = vmul.f32 %v410, 0.25
        %v415 = vld [vmem:[%s3] sm:$0xff]
        %vm416 = vcmask 64512
        %v418 = vsel %vm416, %v411, 0
        %v421 = vsel %vm416, %v412, 0
        %v424 = vsel %vm416, %v413, 0
        %v427 = vsel %vm416, %v414, 0
        %429 = vmatprep.subr.mxu0 0.0
        %430 = vmatpush1.msra.mxu0 %v415
        %431 = vmatprep.subr.mxu0 0.0
        %432 = vmatpush1.msra.mxu0 0.0
        %433 = vmatprep.subr.mxu0 0.0
        %434 = vmatpush1.msra.mxu0 0.0
        %435 = vmatprep.subr.mxu0 0.0
        %436 = vmatpush1.msra.mxu0 0.0
        %437 = vmatprep.subr.mxu0 0.0
        %438 = vmatpush1.msra.mxu0 0.0
        %439 = vmatprep.subr.mxu0 0.0
        %440 = vmatpush1.msra.mxu0 0.0
        %441 = vmatprep.subr.mxu0 0.0
        %442 = vmatpush1.msra.mxu0 0.0
        %443 = vmatprep.subr.mxu0 0.0
        %444 = vmatpush1.msra.mxu0 0.0
        %445 = vmatprep.subr.mxu0 0.0
        %446 = vmatpush1.msra.mxu0 0.0
        %447 = vmatprep.subr.mxu0 0.0
        %448 = vmatpush1.msra.mxu0 0.0
        %449 = vmatprep.subr.mxu0 0.0
        %450 = vmatpush1.msra.mxu0 0.0
        %451 = vmatprep.subr.mxu0 0.0
        %452 = vmatpush1.msra.mxu0 0.0
        %453 = vmatprep.subr.mxu0 0.0
        %454 = vmatpush1.msra.mxu0 0.0
        %455 = vmatprep.subr.mxu0 0.0
        %456 = vmatpush1.msra.mxu0 0.0
        %457 = vmatprep.subr.mxu0 0.0
        %458 = vmatpush1.msra.mxu0 0.0
        %459 = vmatprep.subr.mxu0 0.0
        %460 = vmatpush1.msra.mxu0 0.0
        %461 = vmatprep.subr.mxu0 0.0
        %462 = vmatpush1.msra.mxu0 0.0
        %463 = vmatprep.subr.mxu0 0.0
        %464 = vmatpush1.msra.mxu0 0.0
        %465 = vmatprep.subr.mxu0 0.0
        %466 = vmatpush1.msra.mxu0 0.0
        %467 = vmatprep.subr.mxu0 0.0
        %468 = vmatpush1.msra.mxu0 0.0
        %469 = vmatprep.subr.mxu0 0.0
        %470 = vmatpush1.msra.mxu0 0.0
        %471 = vmatprep.subr.mxu0 0.0
        %472 = vmatpush1.msra.mxu0 0.0
        %473 = vmatprep.subr.mxu0 0.0
        %474 = vmatpush1.msra.mxu0 0.0
        %475 = vmatprep.subr.mxu0 0.0
        %476 = vmatpush1.msra.mxu0 0.0
        %477 = vmatprep.subr.mxu0 0.0
        %478 = vmatpush1.msra.mxu0 0.0
        %479 = vmatprep.subr.mxu0 0.0
        %480 = vmatpush1.msra.mxu0 0.0
        %481 = vmatprep.subr.mxu0 0.0
        %482 = vmatpush1.msra.mxu0 0.0
        %483 = vmatprep.subr.mxu0 0.0
        %484 = vmatpush1.msra.mxu0 0.0
        %485 = vmatprep.subr.mxu0 0.0
        %486 = vmatpush1.msra.mxu0 0.0
        %487 = vmatprep.subr.mxu0 0.0
        %488 = vmatpush1.msra.mxu0 0.0
        %489 = vmatprep.subr.mxu0 0.0
        %490 = vmatpush1.msra.mxu0 0.0
        %491 = vmatprep.subr.mxu0 0.0
        %492 = vmatpush1.msra.mxu0 0.0
        %493 = vmatprep.mubr.f32.mxu0 0.0
        %494 = vmatmul.mubr.f32.gmra.mrb[0].mxu0 %v418
        %v495 = vpop.f32.mrb[0].mxu0
        %v496 = vadd.f32 0.0, %v495
        %v497 = vpop.f32.mrb[0].mxu0
        %498 = vmatprep.mubr.f32.mxu0 0.0
        %499 = vmatmul.mubr.f32.gmra.mrb[0].mxu0 %v421
        %v500 = vpop.f32.mrb[0].mxu0
        %v501 = vadd.f32 0.0, %v500
        %v502 = vpop.f32.mrb[0].mxu0
        %503 = vmatprep.mubr.f32.mxu0 0.0
        %504 = vmatmul.mubr.f32.gmra.mrb[0].mxu0 %v424
        %v505 = vpop.f32.mrb[0].mxu0
        %v506 = vadd.f32 0.0, %v505
        %v507 = vpop.f32.mrb[0].mxu0
        %508 = vmatprep.mubr.f32.mxu0 0.0
        %509 = vmatmul.mubr.f32.gmra.mrb[0].mxu0 %v427
        %v510 = vpop.f32.mrb[0].mxu0
        %v511 = vadd.f32 0.0, %v510
        %v512 = vpop.f32.mrb[0].mxu0
        %513 = vdwg.mxu0
        %vm514 = vcmask 31744
        %515 = vst.msk [vmem:[%s319] sm:$0xff] %vm514, %v496
        %516 = vst.msk [vmem:[%s319 + $0x8] sm:$0xff] %vm514, %v501
        %517 = vst.msk [vmem:[%s319 + $0x10] sm:$0xff] %vm514, %v506
        %518 = vst.msk [vmem:[%s319 + $0x18] sm:$0xff] %vm514, %v511
        %s519 = smul.u32 4, %s20
        %p520 = scmp.lt.s32.totalorder %s19, 1
        %s521 = scalar_select %p520, %s19, 1
        %p522 = scmp.lt.s32.totalorder %s519, 7
        %s523 = scalar_select %p522, %s519, 7
        %s524 = smul.addr %s521, 8
        %s525 = sadd.s32 %s523, %s524
        %s526 = smul.addr %s525, 8
        %s527 = scalar_lea.vmem %s4, %s526
        // Predicated region
        $region75: #{tpu_custom_call.1} parent=69 // pred_check
          %p528 = pneg %p138
        $region76: #{tpu_custom_call.1} parent=69 // pred_check_branch
          %530 = sbr.rel (%p528) target = $region78
        $region77: #{tpu_custom_call.1} parent=69 // pred_region
          %s531 = smul.u32 4, %s20
        $region78: #{tpu_custom_call.1} parent=69 // pred_fallthru
          _
      $region70: #{tpu_custom_call.1} parent=5 // pred_fallthru
        _
      %p532 = scmp.le.s32.totalorder 2, %s10
      // Predicated region
      $region79: #{tpu_custom_call.1} parent=5 // pred_check
        %p533 = pneg %p532
      $region80: #{tpu_custom_call.1} parent=5 // pred_check_branch
        %535 = sbr.rel (%p533) target = $region82
      $region81: #{tpu_custom_call.1} parent=5 // pred_region
        %s536 = ssub.s32 %s10, 2
        // Predicated region
        $region83: #{tpu_custom_call.1} parent=81 // pred_check
          %p537 = pneg %p144
        $region84: #{tpu_custom_call.1} parent=81 // pred_check_branch
          %539 = sbr.rel (%p537) target = $region86
        $region85: #{tpu_custom_call.1} parent=81 // pred_region
          %s540 = smul.u32 4, %s22
          %p541 = scmp.lt.s32.totalorder %s21, 1
          %s542 = scalar_select %p541, %s21, 1
          %p543 = scmp.lt.s32.totalorder %s540, 7
          %s544 = scalar_select %p543, %s540, 7
          %s545 = smul.addr %s542, 8
          %s546 = sadd.s32 %s544, %s545
          %s547 = smul.addr %s546, 8
          %s548 = scalar_lea.vmem %s4, %s547
        $region86: #{tpu_custom_call.1} parent=81 // pred_fallthru
          _
      $region82: #{tpu_custom_call.1} parent=5 // pred_fallthru
        _
    $region6: #{tpu_custom_call.1} parent=1 // loop_footer
      %s14 = sadd.s32 1, %s10
    $region7: #{tpu_custom_call.1} parent=1 // loop_footer_branch
      %9 = sbr.rel target = $region3
    $region8: #{tpu_custom_call.1} parent=1 // loop_exit
      _

</llo_original>
